<compile_context>
chip_gen: v7x
topology: tpu7x:2x2x1
jax: 0.10.0
libtpu: 0.0.40
codegen_flags: <defaults>
</compile_context>

<pallas_src>
import jax
import jax.numpy as jnp
from jax.experimental import pallas as pl
from jax.experimental.pallas import tpu as pltpu

_TILE_BYTES = 2 * 1024 * 1024  # per-operand VMEM tile budget (~2 MiB)


def _fuse_kernel(w_ref, text_ref, vis_ref, out_ref):
    """Elementwise gated fusion: out = vis + w * (text - vis).

    w_ref   : SMEM (1, 1) scalar gate weight (float32)
    text_ref: VMEM (tb, lane) tile of text logits
    vis_ref : VMEM (tb, lane) tile of vis logits
    out_ref : VMEM (tb, lane) tile of fused logits
    """
    t = text_ref[...]
    v = vis_ref[...]
    w = w_ref[0, 0].astype(t.dtype)
    # v + w*(t - v) == w*t + (1 - w)*v, with one fewer multiply/broadcast.
    out_ref[...] = (v + w * (t - v)).astype(out_ref.dtype)


def _pick_lane(n):
    """Largest lane width (multiple of 128) that still yields >= 8 rows."""
    for lane in (2048, 1024, 512, 256, 128):
        if n >= 8 * lane:
            return lane
    return 128


def global_fusion_logits(text_logits, vis_logits, text_features, vis_features,
                         text_weights):
    """JAX/Pallas equivalent of GlobalFusionLogits.forward (alpha_dim=1).

    Returns (fused_logits, text_weights), matching the PyTorch module.
    text_features / vis_features are unused (as in the reference forward).
    """
    del text_features, vis_features  # unused in the reference forward pass
    assert text_logits.shape == vis_logits.shape
    assert text_logits.dtype == vis_logits.dtype

    orig_shape = text_logits.shape
    dtype = text_logits.dtype
    itemsize = jnp.dtype(dtype).itemsize
    n = text_logits.size

    # --- lane-dense layout: view the logits as (rows, lane), lane % 128 == 0.
    lane = _pick_lane(n)
    sublane = {4: 8, 2: 16, 1: 32}.get(itemsize, 8)
    n_rows = -(-n // lane)

    # --- tile the row axis: tile bytes <= ~2 MiB, rows a multiple of sublane.
    budget_rows = max(sublane,
                      (_TILE_BYTES // (lane * itemsize)) // sublane * sublane)
    tb = min(budget_rows, -(-n_rows // sublane) * sublane)
    rows_padded = -(-n_rows // tb) * tb
    n_padded = rows_padded * lane

    def to_tiles(x):
        flat = jnp.ravel(x)
        if n_padded != n:
            flat = jnp.pad(flat, (0, n_padded - n))
        return flat.reshape(rows_padded, lane)

    t2 = to_tiles(text_logits)
    v2 = to_tiles(vis_logits)

    # Scalar gate weight lives in SMEM as a (1, 1) float32.
    w_smem = jnp.reshape(jnp.asarray(text_weights), (1, 1)).astype(jnp.float32)

    grid = (rows_padded // tb,)
    fused2 = pl.pallas_call(
        _fuse_kernel,
        out_shape=jax.ShapeDtypeStruct((rows_padded, lane), dtype),
        grid_spec=pltpu.PrefetchScalarGridSpec(
            num_scalar_prefetch=0,
            grid=grid,
            in_specs=[
                pl.BlockSpec(memory_space=pltpu.SMEM),       # gate weight
                pl.BlockSpec((tb, lane), lambda i: (i, 0)),  # text logits tile
                pl.BlockSpec((tb, lane), lambda i: (i, 0)),  # vis logits tile
            ],
            out_specs=pl.BlockSpec((tb, lane), lambda i: (i, 0)),
        ),
        compiler_params=pltpu.CompilerParams(
            dimension_semantics=("parallel",)),  # independent tiles -> both TCs on v7x
        cost_estimate=pl.CostEstimate(
            flops=2 * n,
            transcendentals=0,
            bytes_accessed=3 * n * itemsize),
    )(w_smem, t2, v2)

    if n_padded != n:
        fused = fused2.reshape(-1)[:n].reshape(orig_shape)
    else:
        fused = fused2.reshape(orig_shape)
    return fused, text_weights


if __name__ == "__main__":
    key = jax.random.PRNGKey(0)
    k1, k2, k3, k4 = jax.random.split(key, 4)

    B, C, D = 2, 256, 32  # batch, num_classes, feature dim (small demo shapes)

    text_logits = jax.random.normal(k1, (B, C), dtype=jnp.float32)
    vis_logits = jax.random.normal(k2, (B, C), dtype=jnp.float32)
    text_features = jax.random.normal(k3, (B, D), dtype=jnp.float32)
    vis_features = jax.random.normal(k4, (B, D), dtype=jnp.float32)

    # Deterministic parameter init matching nn.Parameter(torch.tensor(0.5)).
    text_weights = jnp.asarray(0.5, dtype=jnp.float32)

    fused, w_out = global_fusion_logits(text_logits, vis_logits,
                                        text_features, vis_features,
                                        text_weights)
    fused = jax.block_until_ready(fused)
    w_out = jax.block_until_ready(w_out)

    ref = text_weights * text_logits + (1.0 - text_weights) * vis_logits
    assert jnp.allclose(fused, ref, atol=1e-6), "mismatch vs reference"
    assert jnp.allclose(w_out, text_weights), "weight passthrough mismatch"

    # Ragged case (num_classes not a multiple of 128) exercises the pad path.
    B2, C2 = 2, 16
    tl2 = jax.random.normal(k3, (B2, C2), dtype=jnp.float32)
    vl2 = jax.random.normal(k4, (B2, C2), dtype=jnp.float32)
    fused_r, _ = global_fusion_logits(tl2, vl2, None, None, text_weights)
    fused_r = jax.block_until_ready(fused_r)
    ref_r = text_weights * tl2 + (1.0 - text_weights) * vl2
    assert jnp.allclose(fused_r, ref_r, atol=1e-6), "ragged mismatch vs reference"

    print("KERNEL_OK")
</pallas_src>

<mosaic_0001>
module attributes {stable_mosaic.version = 11 : i64} {
  func.func @_fuse_kernel(%arg0: i32, %arg1: memref<1x1xf32, #tpu.memory_space<smem>>, %arg2: memref<8x128xf32, #tpu.memory_space<vmem>>, %arg3: memref<8x128xf32, #tpu.memory_space<vmem>>, %arg4: memref<8x128xf32, #tpu.memory_space<vmem>>) attributes {dimension_semantics = [#tpu.dimension_semantics<parallel>], iteration_bounds = array<i64: 1>, scalar_prefetch = 0 : i64, scratch_operands = 0 : i64, tpu.core_type = #tpu.core_type<tc>, window_params = [{transform_indices = @transform_0, window_bounds = array<i64: 1, 1>}, {transform_indices = @transform_1, window_bounds = array<i64: 8, 128>}, {transform_indices = @transform_2, window_bounds = array<i64: 8, 128>}, {transform_indices = @transform_3, window_bounds = array<i64: 8, 128>}]} {
    %c0 = arith.constant 0 : index
    %c0_0 = arith.constant 0 : index
    %0 = vector.load %arg2[%c0, %c0_0] : memref<8x128xf32, #tpu.memory_space<vmem>>, vector<8x128xf32>
    %c0_1 = arith.constant 0 : index
    %c0_2 = arith.constant 0 : index
    %1 = vector.load %arg3[%c0_1, %c0_2] : memref<8x128xf32, #tpu.memory_space<vmem>>, vector<8x128xf32>
    %c0_3 = arith.constant 0 : index
    %c0_4 = arith.constant 0 : index
    %2 = memref.load %arg1[%c0_3, %c0_4] : memref<1x1xf32, #tpu.memory_space<smem>>
    %3 = arith.subf %0, %1 : vector<8x128xf32>
    %4 = vector.broadcast %2 : f32 to vector<8x128xf32>
    %5 = arith.mulf %4, %3 : vector<8x128xf32>
    %6 = arith.addf %1, %5 : vector<8x128xf32>
    %c0_5 = arith.constant 0 : index
    %c0_6 = arith.constant 0 : index
    %7 = vector.load %arg4[%c0_5, %c0_6] : memref<8x128xf32, #tpu.memory_space<vmem>>, vector<8x128xf32>
    tpu.vector_store %arg4[%c0_5, %c0_6], %6 {strides = array<i32>} : memref<8x128xf32, #tpu.memory_space<vmem>>, vector<8x128xf32>,
    return
  }
  func.func @transform_0(%arg0: i32) -> (i32, i32) {
    %c0_i32 = arith.constant 0 : i32
    %c0_i32_0 = arith.constant 0 : i32
    %c0_i32_1 = arith.constant 0 : i32
    return %c0_i32, %c0_i32_0 : i32, i32
  }
  func.func @transform_1(%arg0: i32) -> (i32, i32) {
    %c0_i32 = arith.constant 0 : i32
    %c0_i32_0 = arith.constant 0 : i32
    return %arg0, %c0_i32 : i32, i32
  }
  func.func @transform_2(%arg0: i32) -> (i32, i32) {
    %c0_i32 = arith.constant 0 : i32
    %c0_i32_0 = arith.constant 0 : i32
    return %arg0, %c0_i32 : i32, i32
  }
  func.func @transform_3(%arg0: i32) -> (i32, i32) {
    %c0_i32 = arith.constant 0 : i32
    %c0_i32_0 = arith.constant 0 : i32
    return %arg0, %c0_i32 : i32, i32
  }
}

</mosaic_0001>

<llo_original>
// kernel: tpu_custom_call.1
$region0: #{tpu_custom_call.1}
  #allocation0 [shape = 'u32[]', space=smem, size = 0x4, offset = 0x4, fixed_abs, tag = 'smem constant byte address 0x4 - core index']
  #allocation1 [shape = 'u32[144,128]{1,0:T(1,128)}', space=vmem, size = 0x12000, scoped, tag = 'internal scratch']
  #allocation2 [shape = 'f32[1,1]{1,0:T(1,128)S(6)}', space=smem, size = 0x200, scoped, tag = 'scoped memory for tpu_custom_call.1']
  %s0 = inlined_call_operand.<no memory space> [shape: f32[1,1], index: 0, kind: input, shape index: {}]
  %s1 = inlined_call_operand.hbm [shape: f32[8,128], index: 1, kind: input, shape index: {}]
  %s2 = inlined_call_operand.hbm [shape: f32[8,128], index: 2, kind: input, shape index: {}]
  %s3 = inlined_call_operand.hbm [shape: f32[8,128], index: 3, kind: output, shape index: {}]
  %s4 = sld [smem:[#allocation0]]
  $region30: #{tpu_custom_call.1} parent=0
    _
  %s6 = ssub.s32 1, %s4
  %s7 = scalar_select 0, %s6, %s4
  %8 = sst [smem:[#allocation2]] %s0
  $region1: #{tpu_custom_call.1} parent=0
    #allocation3 [shape = 'u8[4096]{0}', space=vmem, size = 0x1000, scoped, tag = 'input window, operand 1, single buffered']
    #allocation4 [shape = 's32[1]{0}', space=sflag, size = 0x4, scoped, tag = 'scoped memory for tpu_custom_call.1']
    #allocation5 [shape = 's32[1]{0}', space=sflag, size = 0x4, scoped, tag = 'scoped memory for tpu_custom_call.1']
    #allocation6 [shape = 'u8[4096]{0}', space=vmem, size = 0x1000, scoped, tag = 'input window, operand 2, single buffered']
    #allocation7 [shape = 's32[1]{0}', space=sflag, size = 0x4, scoped, tag = 'scoped memory for tpu_custom_call.1']
    #allocation8 [shape = 'u8[4096]{0}', space=vmem, size = 0x1000, scoped, tag = 'output window, operand 0, single buffered']
    %9 = vsyncpa [#allocation4], 0
    %10 = vsyncpa [#allocation7], 0
    %11 = vsyncpa [#allocation5], 0
    // Predicated region
    $region2: #{tpu_custom_call.1} parent=1 // pred_check
      _
    $region3: #{tpu_custom_call.1} parent=1 // pred_check_branch
      %13 = sbr.rel (0) target = $region5
    $region4: #{tpu_custom_call.1} parent=1 // pred_region
      _
    $region5: #{tpu_custom_call.1} parent=1 // pred_fallthru
      _
    // Predicated region
    $region6: #{tpu_custom_call.1} parent=1 // pred_check
      _
    $region7: #{tpu_custom_call.1} parent=1 // pred_check_branch
      %15 = sbr.rel (0) target = $region9
    $region8: #{tpu_custom_call.1} parent=1 // pred_region
      %s17 = ssub.s32 128, 128
      %18 = vsyncadd [#allocation4], %s17
      %s20 = sshll.u32 [#allocation3], 4
      %s21 = int_to_ptr.vmem [resolvable:$true] %s20
      %23 = dma.hbm_to_vmem [thread:$0]  %s1, 128, %s21, [#allocation4]
    $region9: #{tpu_custom_call.1} parent=1 // pred_fallthru
      _
    // Predicated region
    $region10: #{tpu_custom_call.1} parent=1 // pred_check
      _
    $region11: #{tpu_custom_call.1} parent=1 // pred_check_branch
      %25 = sbr.rel (0) target = $region13
    $region12: #{tpu_custom_call.1} parent=1 // pred_region
      %s27 = ssub.s32 128, 128
      %28 = vsyncadd [#allocation7], %s27
      %s30 = sshll.u32 [#allocation6], 4
      %s31 = int_to_ptr.vmem [resolvable:$true] %s30
      %33 = dma.hbm_to_vmem [thread:$0]  %s2, 128, %s31, [#allocation7]
    $region13: #{tpu_custom_call.1} parent=1 // pred_fallthru
      _
    // Predicated region
    $region14: #{tpu_custom_call.1} parent=1 // pred_check
      _
    $region15: #{tpu_custom_call.1} parent=1 // pred_check_branch
      %35 = sbr.rel (0) target = $region17
    $region16: #{tpu_custom_call.1} parent=1 // pred_region
      %36 = dma.done [#allocation4], 128
    $region17: #{tpu_custom_call.1} parent=1 // pred_fallthru
      _
    // Predicated region
    $region18: #{tpu_custom_call.1} parent=1 // pred_check
      _
    $region19: #{tpu_custom_call.1} parent=1 // pred_check_branch
      %38 = sbr.rel (0) target = $region21
    $region20: #{tpu_custom_call.1} parent=1 // pred_region
      %39 = dma.done [#allocation7], 128
    $region21: #{tpu_custom_call.1} parent=1 // pred_fallthru
      _
    %v40 = vld [vmem:[#allocation3] sm:$0xff]
    %v41 = vld [vmem:[#allocation6] sm:$0xff]
    %s42 = sld [smem:[#allocation2]]
    %v43 = vsub.f32 %v40, %v41
    %v44 = vstv %s42
    %v45 = vmul.f32 %v44, %v43
    %v46 = vadd.f32 %v41, %v45
    %47 = vst [vmem:[#allocation8] sm:$0xff] %v46
    // Predicated region
    $region22: #{tpu_custom_call.1} parent=1 // pred_check
      _
    $region23: #{tpu_custom_call.1} parent=1 // pred_check_branch
      %49 = sbr.rel (0) target = $region25
    $region24: #{tpu_custom_call.1} parent=1 // pred_region
      %s51 = ssub.s32 128, 128
      %52 = vsyncadd [#allocation5], %s51
      %s54 = sshll.u32 [#allocation8], 4
      %s55 = int_to_ptr.vmem [resolvable:$true] %s54
      %57 = dma.vmem_to_hbm [thread:$0]  %s55, 128, %s3, [#allocation5]
    $region25: #{tpu_custom_call.1} parent=1 // pred_fallthru
      _
    // Predicated region
    $region26: #{tpu_custom_call.1} parent=1 // pred_check
      _
    $region27: #{tpu_custom_call.1} parent=1 // pred_check_branch
      %59 = sbr.rel (0) target = $region29
    $region28: #{tpu_custom_call.1} parent=1 // pred_region
      %60 = dma.done [#allocation5], 128
    $region29: #{tpu_custom_call.1} parent=1 // pred_fallthru
      _
    %61 = vsyncpa [#allocation4], 1
    %62 = vsyncpa [#allocation7], 1
    %63 = vsyncpa [#allocation5], 1

</llo_original>
